<compile_context>
chip_gen: v7x
topology: tpu7x:2x2x1
jax: 0.10.0
libtpu: 0.0.40
codegen_flags: <defaults>
</compile_context>

<pallas_src>
import functools

import jax
import jax.numpy as jnp
import numpy as np
from jax.experimental import pallas as pl
from jax.experimental.pallas import tpu as pltpu  # noqa: F401  (TPU backend / memory spaces)


# ----------------------------------------------------------------------------
# Fused kernel: all LSTM layers + FC head in one invocation.
# refs = (x_ref, [w_ih, w_hh, bias] * num_layers, fc_w, fc_b, out_ref)
#   x_ref  : (T_eff*B, D)     time-major, pre-flattened
#   w_ih   : (in_d, 4H)       w_hh: (H, 4H)      bias: (1, 4H) = b_ih + b_hh
#   fc_w   : (H, O)           fc_b: (1, O)
#   out_ref: (T_eff*B, O)
# ----------------------------------------------------------------------------
def _fused_lstm_fc_kernel(num_layers, hidden_dim, t_eff, batch, *refs):
    x_ref = refs[0]
    layer_refs = refs[1:1 + 3 * num_layers]
    fc_w_ref = refs[1 + 3 * num_layers]
    fc_b_ref = refs[2 + 3 * num_layers]
    out_ref = refs[3 + 3 * num_layers]

    B = batch
    H = hidden_dim
    T = t_eff

    # Current layer's stacked input, shape (T*B, in_d); lives in vregs.
    layer_in = x_ref[...]

    for l in range(num_layers):
        w_ih = layer_refs[3 * l][...]       # (in_d, 4H)
        w_hh = layer_refs[3 * l + 1][...]   # (H, 4H)
        bias = layer_refs[3 * l + 2][...]   # (1, 4H)

        # Hoisted input projection + bias fold: one batched MXU matmul for all
        # timesteps, off the recurrent critical path.
        gates_x = (
            jnp.dot(layer_in, w_ih, preferred_element_type=jnp.float32) + bias
        )  # (T*B, 4H)

        h = jnp.zeros((B, H), jnp.float32)
        c = jnp.zeros((B, H), jnp.float32)
        outs = []
        for t in range(T):
            # Only the recurrent matmul + gate math remain on the serial chain.
            gates = gates_x[t * B:(t + 1) * B, :] + jnp.dot(
                h, w_hh, preferred_element_type=jnp.float32
            )  # (B, 4H), gate order i, f, g, o (PyTorch layout)

            # Two full-vreg transcendentals instead of four masked sub-vreg ones.
            sig = jax.nn.sigmoid(gates)
            th = jnp.tanh(gates)
            i = sig[:, 0 * H:1 * H]
            f = sig[:, 1 * H:2 * H]
            g = th[:, 2 * H:3 * H]
            o = sig[:, 3 * H:4 * H]

            c = f * c + i * g
            h = o * jnp.tanh(c)
            outs.append(h)

        # Stacked hidden states become the next layer's (or the head's) input.
        layer_in = jnp.concatenate(outs, axis=0)  # (T*B, H)

    # Fused FC epilogue: one matmul, one store.
    fc_w = fc_w_ref[...]   # (H, O)
    fc_b = fc_b_ref[...]   # (1, O)
    out_ref[...] = (
        jnp.dot(layer_in, fc_w, preferred_element_type=jnp.float32) + fc_b
    ).astype(out_ref.dtype)


# ----------------------------------------------------------------------------
# One-time parameter preparation: hoist transposes and bias sums out of the
# forward path (PyTorch layout -> kernel layout).
# ----------------------------------------------------------------------------
def prepare_params(params):
    layers = []
    for lyr in params["lstm"]:
        layers.append((
            jnp.transpose(lyr["w_ih"]),                       # (in_d, 4H)
            jnp.transpose(lyr["w_hh"]),                       # (H, 4H)
            (lyr["b_ih"] + lyr["b_hh"]).reshape(1, -1),       # (1, 4H)
        ))
    return {
        "layers": tuple(layers),
        "fc_w_t": jnp.transpose(params["fc_w"]),              # (H, O)
        "fc_b": params["fc_b"].reshape(1, -1),                # (1, O)
    }


# ----------------------------------------------------------------------------
# Model forward: matches the PyTorch module (eval mode).
# ----------------------------------------------------------------------------
def model_forward(x_btd, prepped, pred_len):
    """x_btd: (B, T, D) batch-first input; returns (B, min(T, pred_len), output_dim)."""
    B, T, D = x_btd.shape
    layers = prepped["layers"]
    num_layers = len(layers)
    H = layers[0][1].shape[0]            # w_hh_t: (H, 4H)
    O = prepped["fc_w_t"].shape[1]

    # Dead-timestep elimination: only steps t < pred_len feed the head.
    t_eff = min(T, pred_len)
    x_tbd = jnp.transpose(x_btd[:, :t_eff, :], (1, 0, 2))   # (t_eff, B, D) time-major
    x_flat = x_tbd.reshape(t_eff * B, D)                    # (t_eff*B, D)

    flat_ins = [x_flat]
    in_specs = [pl.BlockSpec((t_eff * B, D), lambda: (0, 0))]
    for (w_ih_t, w_hh_t, bias) in layers:
        flat_ins += [w_ih_t, w_hh_t, bias]
        in_specs += [
            pl.BlockSpec(w_ih_t.shape, lambda: (0, 0)),
            pl.BlockSpec(w_hh_t.shape, lambda: (0, 0)),
            pl.BlockSpec(bias.shape, lambda: (0, 0)),
        ]
    flat_ins += [prepped["fc_w_t"], prepped["fc_b"]]
    in_specs += [
        pl.BlockSpec(prepped["fc_w_t"].shape, lambda: (0, 0)),
        pl.BlockSpec(prepped["fc_b"].shape, lambda: (0, 0)),
    ]

    out_flat = pl.pallas_call(
        functools.partial(_fused_lstm_fc_kernel, num_layers, H, t_eff, B),
        out_shape=jax.ShapeDtypeStruct((t_eff * B, O), jnp.float32),
        in_specs=in_specs,
        out_specs=pl.BlockSpec((t_eff * B, O), lambda: (0, 0)),
    )(*flat_ins)

    out_tbo = out_flat.reshape(t_eff, B, O)
    return jnp.transpose(out_tbo, (1, 0, 2))   # -> (B, t_eff, O)


# ----------------------------------------------------------------------------
# Pure-JAX reference for correctness checking (full-T recurrence, then slice,
# exactly as the PyTorch module does).
# ----------------------------------------------------------------------------
def reference_forward(x_btd, params, pred_len):
    B, T, D = x_btd.shape
    seq = x_btd
    for layer in params["lstm"]:
        H = layer["w_hh"].shape[1]
        w_ih_t, w_hh_t = layer["w_ih"].T, layer["w_hh"].T
        bias = layer["b_ih"] + layer["b_hh"]

        def step(carry, x_t):
            h_prev, c_prev = carry
            gates = x_t @ w_ih_t + h_prev @ w_hh_t + bias
            i = jax.nn.sigmoid(gates[:, 0 * H:1 * H])
            f = jax.nn.sigmoid(gates[:, 1 * H:2 * H])
            g = jnp.tanh(gates[:, 2 * H:3 * H])
            o = jax.nn.sigmoid(gates[:, 3 * H:4 * H])
            c = f * c_prev + i * g
            h = o * jnp.tanh(c)
            return (h, c), h

        init = (jnp.zeros((B, H), jnp.float32), jnp.zeros((B, H), jnp.float32))
        _, hs = jax.lax.scan(step, init, jnp.transpose(seq, (1, 0, 2)))
        seq = jnp.transpose(hs, (1, 0, 2))
    pred = seq[:, :pred_len, :]
    return pred @ params["fc_w"].T + params["fc_b"]


# ----------------------------------------------------------------------------
# Deterministic parameter initialization (PyTorch-like uniform(-1/sqrt(H), 1/sqrt(H))).
# ----------------------------------------------------------------------------
def init_params(key, input_dim, hidden_dim, layer_dim, output_dim):
    bound = 1.0 / np.sqrt(hidden_dim)
    layers = []
    for l in range(layer_dim):
        in_d = input_dim if l == 0 else hidden_dim
        key, k1, k2, k3, k4 = jax.random.split(key, 5)
        layers.append({
            "w_ih": jax.random.uniform(k1, (4 * hidden_dim, in_d), jnp.float32, -bound, bound),
            "w_hh": jax.random.uniform(k2, (4 * hidden_dim, hidden_dim), jnp.float32, -bound, bound),
            "b_ih": jax.random.uniform(k3, (4 * hidden_dim,), jnp.float32, -bound, bound),
            "b_hh": jax.random.uniform(k4, (4 * hidden_dim,), jnp.float32, -bound, bound),
        })
    key, kw, kb = jax.random.split(key, 3)
    fc_bound = 1.0 / np.sqrt(hidden_dim)
    return {
        "lstm": layers,
        "fc_w": jax.random.uniform(kw, (output_dim, hidden_dim), jnp.float32, -fc_bound, fc_bound),
        "fc_b": jax.random.uniform(kb, (output_dim,), jnp.float32, -fc_bound, fc_bound),
    }


if __name__ == "__main__":
    # config: input_dim = output_dim = 4, hidden_dim = 32, layer_dim = 2,
    #         pred_len = 4, batch = 2, seq = 8
    B, T = 2, 8
    output_dim = 4
    input_dim = output_dim
    hidden_dim = 32
    layer_dim = 2
    pred_len = 4

    key = jax.random.PRNGKey(0)
    key, kx = jax.random.split(key)
    x = jax.random.normal(kx, (B, T, input_dim), dtype=jnp.float32)

    params = init_params(key, input_dim, hidden_dim, layer_dim, output_dim)
    prepped = prepare_params(params)   # one-time layout prep (transposes, bias sums)

    fwd = jax.jit(functools.partial(model_forward, pred_len=pred_len))
    y = fwd(x, prepped)
    y = jax.block_until_ready(y)

    y_ref = reference_forward(x, params, pred_len)
    assert y.shape == (B, pred_len, output_dim), y.shape
    np.testing.assert_allclose(np.asarray(y), np.asarray(y_ref), atol=1e-4, rtol=1e-4)

    print("KERNEL_OK")
</pallas_src>

<mosaic_0001>
module attributes {stable_mosaic.version = 11 : i64} {
  func.func @_fused_lstm_fc_kernel(%arg0: memref<8x4xf32, #tpu.memory_space<vmem>>, %arg1: memref<4x128xf32, #tpu.memory_space<vmem>>, %arg2: memref<32x128xf32, #tpu.memory_space<vmem>>, %arg3: memref<1x128xf32, #tpu.memory_space<vmem>>, %arg4: memref<32x128xf32, #tpu.memory_space<vmem>>, %arg5: memref<32x128xf32, #tpu.memory_space<vmem>>, %arg6: memref<1x128xf32, #tpu.memory_space<vmem>>, %arg7: memref<32x4xf32, #tpu.memory_space<vmem>>, %arg8: memref<1x4xf32, #tpu.memory_space<vmem>>, %arg9: memref<8x4xf32, #tpu.memory_space<vmem>>) attributes {dimension_semantics = [], scalar_prefetch = 0 : i64, scratch_operands = 0 : i64, tpu.core_type = #tpu.core_type<tc>} {
    %c0 = arith.constant 0 : index
    %c0_0 = arith.constant 0 : index
    %0 = vector.load %arg0[%c0, %c0_0] : memref<8x4xf32, #tpu.memory_space<vmem>>, vector<8x4xf32>
    %c0_1 = arith.constant 0 : index
    %c0_2 = arith.constant 0 : index
    %1 = vector.load %arg1[%c0_1, %c0_2] : memref<4x128xf32, #tpu.memory_space<vmem>>, vector<4x128xf32>
    %c0_3 = arith.constant 0 : index
    %c0_4 = arith.constant 0 : index
    %2 = vector.load %arg2[%c0_3, %c0_4] : memref<32x128xf32, #tpu.memory_space<vmem>>, vector<32x128xf32>
    %c0_5 = arith.constant 0 : index
    %c0_6 = arith.constant 0 : index
    %3 = vector.load %arg3[%c0_5, %c0_6] : memref<1x128xf32, #tpu.memory_space<vmem>>, vector<1x128xf32>
    %cst = arith.constant dense<0.000000e+00> : vector<8x128xf32>
    %4 = tpu.matmul %0, %1, %cst {dimension_numbers = #tpu.dot_dimension_numbers<[1], [0], [0], [1], [0, 0, 1, 1], [], []>} : vector<8x4xf32>, vector<4x128xf32>, vector<8x128xf32> -> vector<8x128xf32>
    %5 = vector.broadcast %3 : vector<1x128xf32> to vector<8x128xf32>
    %6 = arith.addf %4, %5 : vector<8x128xf32>
    %cst_7 = arith.constant 0.000000e+00 : f32
    %7 = vector.broadcast %cst_7 : f32 to vector<2x32xf32>
    %cst_8 = arith.constant 0.000000e+00 : f32
    %8 = vector.broadcast %cst_8 : f32 to vector<2x32xf32>
    %9 = vector.extract_strided_slice %6 {offsets = [0, 0], sizes = [2, 128], strides = [1, 1]} : vector<8x128xf32> to vector<2x128xf32>
    %cst_9 = arith.constant dense<0.000000e+00> : vector<2x128xf32>
    %10 = tpu.matmul %7, %2, %cst_9 {dimension_numbers = #tpu.dot_dimension_numbers<[1], [0], [0], [1], [0, 0, 1, 1], [], []>} : vector<2x32xf32>, vector<32x128xf32>, vector<2x128xf32> -> vector<2x128xf32>
    %11 = arith.addf %9, %10 : vector<2x128xf32>
    %12 = arith.negf %11 : vector<2x128xf32>
    %13 = math.exp %12 : vector<2x128xf32>
    %cst_10 = arith.constant 1.000000e+00 : f32
    %14 = vector.broadcast %cst_10 : f32 to vector<2x128xf32>
    %15 = arith.addf %14, %13 : vector<2x128xf32>
    %16 = arith.divf %14, %15 : vector<2x128xf32>
    %17 = math.tanh %11 : vector<2x128xf32>
    %18 = vector.extract_strided_slice %16 {offsets = [0, 0], sizes = [2, 32], strides = [1, 1]} : vector<2x128xf32> to vector<2x32xf32>
    %19 = vector.extract_strided_slice %16 {offsets = [0, 32], sizes = [2, 32], strides = [1, 1]} : vector<2x128xf32> to vector<2x32xf32>
    %20 = vector.extract_strided_slice %17 {offsets = [0, 64], sizes = [2, 32], strides = [1, 1]} : vector<2x128xf32> to vector<2x32xf32>
    %21 = vector.extract_strided_slice %16 {offsets = [0, 96], sizes = [2, 32], strides = [1, 1]} : vector<2x128xf32> to vector<2x32xf32>
    %22 = arith.mulf %19, %8 : vector<2x32xf32>
    %23 = arith.mulf %18, %20 : vector<2x32xf32>
    %24 = arith.addf %22, %23 : vector<2x32xf32>
    %25 = math.tanh %24 : vector<2x32xf32>
    %26 = arith.mulf %21, %25 : vector<2x32xf32>
    %27 = vector.extract_strided_slice %6 {offsets = [2, 0], sizes = [2, 128], strides = [1, 1]} : vector<8x128xf32> to vector<2x128xf32>
    %cst_11 = arith.constant dense<0.000000e+00> : vector<2x128xf32>
    %28 = tpu.matmul %26, %2, %cst_11 {dimension_numbers = #tpu.dot_dimension_numbers<[1], [0], [0], [1], [0, 0, 1, 1], [], []>} : vector<2x32xf32>, vector<32x128xf32>, vector<2x128xf32> -> vector<2x128xf32>
    %29 = arith.addf %27, %28 : vector<2x128xf32>
    %30 = arith.negf %29 : vector<2x128xf32>
    %31 = math.exp %30 : vector<2x128xf32>
    %cst_12 = arith.constant 1.000000e+00 : f32
    %32 = vector.broadcast %cst_12 : f32 to vector<2x128xf32>
    %33 = arith.addf %32, %31 : vector<2x128xf32>
    %34 = arith.divf %32, %33 : vector<2x128xf32>
    %35 = math.tanh %29 : vector<2x128xf32>
    %36 = vector.extract_strided_slice %34 {offsets = [0, 0], sizes = [2, 32], strides = [1, 1]} : vector<2x128xf32> to vector<2x32xf32>
    %37 = vector.extract_strided_slice %34 {offsets = [0, 32], sizes = [2, 32], strides = [1, 1]} : vector<2x128xf32> to vector<2x32xf32>
    %38 = vector.extract_strided_slice %35 {offsets = [0, 64], sizes = [2, 32], strides = [1, 1]} : vector<2x128xf32> to vector<2x32xf32>
    %39 = vector.extract_strided_slice %34 {offsets = [0, 96], sizes = [2, 32], strides = [1, 1]} : vector<2x128xf32> to vector<2x32xf32>
    %40 = arith.mulf %37, %24 : vector<2x32xf32>
    %41 = arith.mulf %36, %38 : vector<2x32xf32>
    %42 = arith.addf %40, %41 : vector<2x32xf32>
    %43 = math.tanh %42 : vector<2x32xf32>
    %44 = arith.mulf %39, %43 : vector<2x32xf32>
    %45 = vector.extract_strided_slice %6 {offsets = [4, 0], sizes = [2, 128], strides = [1, 1]} : vector<8x128xf32> to vector<2x128xf32>
    %cst_13 = arith.constant dense<0.000000e+00> : vector<2x128xf32>
    %46 = tpu.matmul %44, %2, %cst_13 {dimension_numbers = #tpu.dot_dimension_numbers<[1], [0], [0], [1], [0, 0, 1, 1], [], []>} : vector<2x32xf32>, vector<32x128xf32>, vector<2x128xf32> -> vector<2x128xf32>
    %47 = arith.addf %45, %46 : vector<2x128xf32>
    %48 = arith.negf %47 : vector<2x128xf32>
    %49 = math.exp %48 : vector<2x128xf32>
    %cst_14 = arith.constant 1.000000e+00 : f32
    %50 = vector.broadcast %cst_14 : f32 to vector<2x128xf32>
    %51 = arith.addf %50, %49 : vector<2x128xf32>
    %52 = arith.divf %50, %51 : vector<2x128xf32>
    %53 = math.tanh %47 : vector<2x128xf32>
    %54 = vector.extract_strided_slice %52 {offsets = [0, 0], sizes = [2, 32], strides = [1, 1]} : vector<2x128xf32> to vector<2x32xf32>
    %55 = vector.extract_strided_slice %52 {offsets = [0, 32], sizes = [2, 32], strides = [1, 1]} : vector<2x128xf32> to vector<2x32xf32>
    %56 = vector.extract_strided_slice %53 {offsets = [0, 64], sizes = [2, 32], strides = [1, 1]} : vector<2x128xf32> to vector<2x32xf32>
    %57 = vector.extract_strided_slice %52 {offsets = [0, 96], sizes = [2, 32], strides = [1, 1]} : vector<2x128xf32> to vector<2x32xf32>
    %58 = arith.mulf %55, %42 : vector<2x32xf32>
    %59 = arith.mulf %54, %56 : vector<2x32xf32>
    %60 = arith.addf %58, %59 : vector<2x32xf32>
    %61 = math.tanh %60 : vector<2x32xf32>
    %62 = arith.mulf %57, %61 : vector<2x32xf32>
    %63 = vector.extract_strided_slice %6 {offsets = [6, 0], sizes = [2, 128], strides = [1, 1]} : vector<8x128xf32> to vector<2x128xf32>
    %cst_15 = arith.constant dense<0.000000e+00> : vector<2x128xf32>
    %64 = tpu.matmul %62, %2, %cst_15 {dimension_numbers = #tpu.dot_dimension_numbers<[1], [0], [0], [1], [0, 0, 1, 1], [], []>} : vector<2x32xf32>, vector<32x128xf32>, vector<2x128xf32> -> vector<2x128xf32>
    %65 = arith.addf %63, %64 : vector<2x128xf32>
    %66 = arith.negf %65 : vector<2x128xf32>
    %67 = math.exp %66 : vector<2x128xf32>
    %cst_16 = arith.constant 1.000000e+00 : f32
    %68 = vector.broadcast %cst_16 : f32 to vector<2x128xf32>
    %69 = arith.addf %68, %67 : vector<2x128xf32>
    %70 = arith.divf %68, %69 : vector<2x128xf32>
    %71 = math.tanh %65 : vector<2x128xf32>
    %72 = vector.extract_strided_slice %70 {offsets = [0, 0], sizes = [2, 32], strides = [1, 1]} : vector<2x128xf32> to vector<2x32xf32>
    %73 = vector.extract_strided_slice %70 {offsets = [0, 32], sizes = [2, 32], strides = [1, 1]} : vector<2x128xf32> to vector<2x32xf32>
    %74 = vector.extract_strided_slice %71 {offsets = [0, 64], sizes = [2, 32], strides = [1, 1]} : vector<2x128xf32> to vector<2x32xf32>
    %75 = vector.extract_strided_slice %70 {offsets = [0, 96], sizes = [2, 32], strides = [1, 1]} : vector<2x128xf32> to vector<2x32xf32>
    %76 = arith.mulf %73, %60 : vector<2x32xf32>
    %77 = arith.mulf %72, %74 : vector<2x32xf32>
    %78 = arith.addf %76, %77 : vector<2x32xf32>
    %79 = math.tanh %78 : vector<2x32xf32>
    %80 = arith.mulf %75, %79 : vector<2x32xf32>
    %81 = tpu.concatenate %26, %44, %62, %80 in 0 : vector<2x32xf32>, vector<2x32xf32>, vector<2x32xf32>, vector<2x32xf32> -> vector<8x32xf32>
    %c0_17 = arith.constant 0 : index
    %c0_18 = arith.constant 0 : index
    %82 = vector.load %arg4[%c0_17, %c0_18] : memref<32x128xf32, #tpu.memory_space<vmem>>, vector<32x128xf32>
    %c0_19 = arith.constant 0 : index
    %c0_20 = arith.constant 0 : index
    %83 = vector.load %arg5[%c0_19, %c0_20] : memref<32x128xf32, #tpu.memory_space<vmem>>, vector<32x128xf32>
    %c0_21 = arith.constant 0 : index
    %c0_22 = arith.constant 0 : index
    %84 = vector.load %arg6[%c0_21, %c0_22] : memref<1x128xf32, #tpu.memory_space<vmem>>, vector<1x128xf32>
    %cst_23 = arith.constant dense<0.000000e+00> : vector<8x128xf32>
    %85 = tpu.matmul %81, %82, %cst_23 {dimension_numbers = #tpu.dot_dimension_numbers<[1], [0], [0], [1], [0, 0, 1, 1], [], []>} : vector<8x32xf32>, vector<32x128xf32>, vector<8x128xf32> -> vector<8x128xf32>
    %86 = vector.broadcast %84 : vector<1x128xf32> to vector<8x128xf32>
    %87 = arith.addf %85, %86 : vector<8x128xf32>
    %cst_24 = arith.constant 0.000000e+00 : f32
    %88 = vector.broadcast %cst_24 : f32 to vector<2x32xf32>
    %cst_25 = arith.constant 0.000000e+00 : f32
    %89 = vector.broadcast %cst_25 : f32 to vector<2x32xf32>
    %90 = vector.extract_strided_slice %87 {offsets = [0, 0], sizes = [2, 128], strides = [1, 1]} : vector<8x128xf32> to vector<2x128xf32>
    %cst_26 = arith.constant dense<0.000000e+00> : vector<2x128xf32>
    %91 = tpu.matmul %88, %83, %cst_26 {dimension_numbers = #tpu.dot_dimension_numbers<[1], [0], [0], [1], [0, 0, 1, 1], [], []>} : vector<2x32xf32>, vector<32x128xf32>, vector<2x128xf32> -> vector<2x128xf32>
    %92 = arith.addf %90, %91 : vector<2x128xf32>
    %93 = arith.negf %92 : vector<2x128xf32>
    %94 = math.exp %93 : vector<2x128xf32>
    %cst_27 = arith.constant 1.000000e+00 : f32
    %95 = vector.broadcast %cst_27 : f32 to vector<2x128xf32>
    %96 = arith.addf %95, %94 : vector<2x128xf32>
    %97 = arith.divf %95, %96 : vector<2x128xf32>
    %98 = math.tanh %92 : vector<2x128xf32>
    %99 = vector.extract_strided_slice %97 {offsets = [0, 0], sizes = [2, 32], strides = [1, 1]} : vector<2x128xf32> to vector<2x32xf32>
    %100 = vector.extract_strided_slice %97 {offsets = [0, 32], sizes = [2, 32], strides = [1, 1]} : vector<2x128xf32> to vector<2x32xf32>
    %101 = vector.extract_strided_slice %98 {offsets = [0, 64], sizes = [2, 32], strides = [1, 1]} : vector<2x128xf32> to vector<2x32xf32>
    %102 = vector.extract_strided_slice %97 {offsets = [0, 96], sizes = [2, 32], strides = [1, 1]} : vector<2x128xf32> to vector<2x32xf32>
    %103 = arith.mulf %100, %89 : vector<2x32xf32>
    %104 = arith.mulf %99, %101 : vector<2x32xf32>
    %105 = arith.addf %103, %104 : vector<2x32xf32>
    %106 = math.tanh %105 : vector<2x32xf32>
    %107 = arith.mulf %102, %106 : vector<2x32xf32>
    %108 = vector.extract_strided_slice %87 {offsets = [2, 0], sizes = [2, 128], strides = [1, 1]} : vector<8x128xf32> to vector<2x128xf32>
    %cst_28 = arith.constant dense<0.000000e+00> : vector<2x128xf32>
    %109 = tpu.matmul %107, %83, %cst_28 {dimension_numbers = #tpu.dot_dimension_numbers<[1], [0], [0], [1], [0, 0, 1, 1], [], []>} : vector<2x32xf32>, vector<32x128xf32>, vector<2x128xf32> -> vector<2x128xf32>
    %110 = arith.addf %108, %109 : vector<2x128xf32>
    %111 = arith.negf %110 : vector<2x128xf32>
    %112 = math.exp %111 : vector<2x128xf32>
    %cst_29 = arith.constant 1.000000e+00 : f32
    %113 = vector.broadcast %cst_29 : f32 to vector<2x128xf32>
    %114 = arith.addf %113, %112 : vector<2x128xf32>
    %115 = arith.divf %113, %114 : vector<2x128xf32>
    %116 = math.tanh %110 : vector<2x128xf32>
    %117 = vector.extract_strided_slice %115 {offsets = [0, 0], sizes = [2, 32], strides = [1, 1]} : vector<2x128xf32> to vector<2x32xf32>
    %118 = vector.extract_strided_slice %115 {offsets = [0, 32], sizes = [2, 32], strides = [1, 1]} : vector<2x128xf32> to vector<2x32xf32>
    %119 = vector.extract_strided_slice %116 {offsets = [0, 64], sizes = [2, 32], strides = [1, 1]} : vector<2x128xf32> to vector<2x32xf32>
    %120 = vector.extract_strided_slice %115 {offsets = [0, 96], sizes = [2, 32], strides = [1, 1]} : vector<2x128xf32> to vector<2x32xf32>
    %121 = arith.mulf %118, %105 : vector<2x32xf32>
    %122 = arith.mulf %117, %119 : vector<2x32xf32>
    %123 = arith.addf %121, %122 : vector<2x32xf32>
    %124 = math.tanh %123 : vector<2x32xf32>
    %125 = arith.mulf %120, %124 : vector<2x32xf32>
    %126 = vector.extract_strided_slice %87 {offsets = [4, 0], sizes = [2, 128], strides = [1, 1]} : vector<8x128xf32> to vector<2x128xf32>
    %cst_30 = arith.constant dense<0.000000e+00> : vector<2x128xf32>
    %127 = tpu.matmul %125, %83, %cst_30 {dimension_numbers = #tpu.dot_dimension_numbers<[1], [0], [0], [1], [0, 0, 1, 1], [], []>} : vector<2x32xf32>, vector<32x128xf32>, vector<2x128xf32> -> vector<2x128xf32>
    %128 = arith.addf %126, %127 : vector<2x128xf32>
    %129 = arith.negf %128 : vector<2x128xf32>
    %130 = math.exp %129 : vector<2x128xf32>
    %cst_31 = arith.constant 1.000000e+00 : f32
    %131 = vector.broadcast %cst_31 : f32 to vector<2x128xf32>
    %132 = arith.addf %131, %130 : vector<2x128xf32>
    %133 = arith.divf %131, %132 : vector<2x128xf32>
    %134 = math.tanh %128 : vector<2x128xf32>
    %135 = vector.extract_strided_slice %133 {offsets = [0, 0], sizes = [2, 32], strides = [1, 1]} : vector<2x128xf32> to vector<2x32xf32>
    %136 = vector.extract_strided_slice %133 {offsets = [0, 32], sizes = [2, 32], strides = [1, 1]} : vector<2x128xf32> to vector<2x32xf32>
    %137 = vector.extract_strided_slice %134 {offsets = [0, 64], sizes = [2, 32], strides = [1, 1]} : vector<2x128xf32> to vector<2x32xf32>
    %138 = vector.extract_strided_slice %133 {offsets = [0, 96], sizes = [2, 32], strides = [1, 1]} : vector<2x128xf32> to vector<2x32xf32>
    %139 = arith.mulf %136, %123 : vector<2x32xf32>
    %140 = arith.mulf %135, %137 : vector<2x32xf32>
    %141 = arith.addf %139, %140 : vector<2x32xf32>
    %142 = math.tanh %141 : vector<2x32xf32>
    %143 = arith.mulf %138, %142 : vector<2x32xf32>
    %144 = vector.extract_strided_slice %87 {offsets = [6, 0], sizes = [2, 128], strides = [1, 1]} : vector<8x128xf32> to vector<2x128xf32>
    %cst_32 = arith.constant dense<0.000000e+00> : vector<2x128xf32>
    %145 = tpu.matmul %143, %83, %cst_32 {dimension_numbers = #tpu.dot_dimension_numbers<[1], [0], [0], [1], [0, 0, 1, 1], [], []>} : vector<2x32xf32>, vector<32x128xf32>, vector<2x128xf32> -> vector<2x128xf32>
    %146 = arith.addf %144, %145 : vector<2x128xf32>
    %147 = arith.negf %146 : vector<2x128xf32>
    %148 = math.exp %147 : vector<2x128xf32>
    %cst_33 = arith.constant 1.000000e+00 : f32
    %149 = vector.broadcast %cst_33 : f32 to vector<2x128xf32>
    %150 = arith.addf %149, %148 : vector<2x128xf32>
    %151 = arith.divf %149, %150 : vector<2x128xf32>
    %152 = math.tanh %146 : vector<2x128xf32>
    %153 = vector.extract_strided_slice %151 {offsets = [0, 0], sizes = [2, 32], strides = [1, 1]} : vector<2x128xf32> to vector<2x32xf32>
    %154 = vector.extract_strided_slice %151 {offsets = [0, 32], sizes = [2, 32], strides = [1, 1]} : vector<2x128xf32> to vector<2x32xf32>
    %155 = vector.extract_strided_slice %152 {offsets = [0, 64], sizes = [2, 32], strides = [1, 1]} : vector<2x128xf32> to vector<2x32xf32>
    %156 = vector.extract_strided_slice %151 {offsets = [0, 96], sizes = [2, 32], strides = [1, 1]} : vector<2x128xf32> to vector<2x32xf32>
    %157 = arith.mulf %154, %141 : vector<2x32xf32>
    %158 = arith.mulf %153, %155 : vector<2x32xf32>
    %159 = arith.addf %157, %158 : vector<2x32xf32>
    %160 = math.tanh %159 : vector<2x32xf32>
    %161 = arith.mulf %156, %160 : vector<2x32xf32>
    %162 = tpu.concatenate %107, %125, %143, %161 in 0 : vector<2x32xf32>, vector<2x32xf32>, vector<2x32xf32>, vector<2x32xf32> -> vector<8x32xf32>
    %c0_34 = arith.constant 0 : index
    %c0_35 = arith.constant 0 : index
    %163 = vector.load %arg7[%c0_34, %c0_35] : memref<32x4xf32, #tpu.memory_space<vmem>>, vector<32x4xf32>
    %c0_36 = arith.constant 0 : index
    %c0_37 = arith.constant 0 : index
    %164 = vector.load %arg8[%c0_36, %c0_37] : memref<1x4xf32, #tpu.memory_space<vmem>>, vector<1x4xf32>
    %cst_38 = arith.constant dense<0.000000e+00> : vector<8x4xf32>
    %165 = tpu.matmul %162, %163, %cst_38 {dimension_numbers = #tpu.dot_dimension_numbers<[1], [0], [0], [1], [0, 0, 1, 1], [], []>} : vector<8x32xf32>, vector<32x4xf32>, vector<8x4xf32> -> vector<8x4xf32>
    %166 = vector.broadcast %164 : vector<1x4xf32> to vector<8x4xf32>
    %167 = arith.addf %165, %166 : vector<8x4xf32>
    %c0_39 = arith.constant 0 : index
    %c0_40 = arith.constant 0 : index
    %168 = vector.load %arg9[%c0_39, %c0_40] : memref<8x4xf32, #tpu.memory_space<vmem>>, vector<8x4xf32>
    tpu.vector_store %arg9[%c0_39, %c0_40], %167 {strides = array<i32>} : memref<8x4xf32, #tpu.memory_space<vmem>>, vector<8x4xf32>,
    return
  }
}

</mosaic_0001>

<llo_original>
// kernel: model_forward.1
$region0: #{model_forward.1}
  #allocation0 [shape = 'u32[]', space=smem, size = 0x4, offset = 0x4, fixed_abs, tag = 'smem constant byte address 0x4 - core index']
  #allocation1 [shape = 'u32[144,128]{1,0:T(1,128)}', space=vmem, size = 0x12000, scoped, tag = 'internal scratch']
  %s0 = inlined_call_operand.vmem [shape: f32[8,4], index: 0, kind: input, shape index: {}]
  %s1 = inlined_call_operand.hbm [shape: f32[4,128], index: 1, kind: input, shape index: {}]
  %s2 = inlined_call_operand.vmem [shape: f32[32,128], index: 2, kind: input, shape index: {}]
  %s3 = inlined_call_operand.vmem [shape: f32[1,128], index: 3, kind: input, shape index: {}]
  %s4 = inlined_call_operand.vmem [shape: f32[32,128], index: 4, kind: input, shape index: {}]
  %s5 = inlined_call_operand.vmem [shape: f32[32,128], index: 5, kind: input, shape index: {}]
  %s6 = inlined_call_operand.vmem [shape: f32[1,128], index: 6, kind: input, shape index: {}]
  %s7 = inlined_call_operand.vmem [shape: f32[32,4], index: 7, kind: input, shape index: {}]
  %s8 = inlined_call_operand.hbm [shape: f32[1,4], index: 8, kind: input, shape index: {}]
  %s9 = inlined_call_operand.vmem [shape: f32[8,4], index: 9, kind: output, shape index: {}]
  %s10 = sld [smem:[#allocation0]]
  $region54: #{model_forward.1} parent=0
    _
  %s12 = ssub.s32 1, %s10
  %s13 = scalar_select 0, %s12, %s10
  $region1: #{model_forward.1} parent=0
    #allocation2 [shape = 'u8[2048]{0}', space=vmem, size = 0x800, scoped, tag = 'input window, operand 1, single buffered']
    #allocation3 [shape = 's32[1]{0}', space=sflag, size = 0x4, scoped, tag = 'scoped memory for model_forward.1']
    #allocation4 [shape = 'u8[512]{0}', space=vmem, size = 0x400, scoped, tag = 'input window, operand 8, single buffered']
    #allocation5 [shape = 's32[1]{0}', space=sflag, size = 0x4, scoped, tag = 'scoped memory for model_forward.1']
    %14 = vsyncpa [#allocation3], 0
    %15 = vsyncpa [#allocation5], 0
    // Predicated region
    $region2: #{model_forward.1} parent=1 // pred_check
      _
    $region3: #{model_forward.1} parent=1 // pred_check_branch
      %17 = sbr.rel (0) target = $region5
    $region4: #{model_forward.1} parent=1 // pred_region
      _
    $region5: #{model_forward.1} parent=1 // pred_fallthru
      _
    // Predicated region
    $region6: #{model_forward.1} parent=1 // pred_check
      _
    $region7: #{model_forward.1} parent=1 // pred_check_branch
      %19 = sbr.rel (0) target = $region9
    $region8: #{model_forward.1} parent=1 // pred_region
      %s21 = ssub.s32 64, 64
      %22 = vsyncadd [#allocation3], %s21
      %s24 = sshll.u32 [#allocation2], 4
      %s25 = int_to_ptr.vmem [resolvable:$true] %s24
      %27 = dma.hbm_to_vmem [thread:$0]  %s1, 64, %s25, [#allocation3]
    $region9: #{model_forward.1} parent=1 // pred_fallthru
      _
    // Predicated region
    $region10: #{model_forward.1} parent=1 // pred_check
      _
    $region11: #{model_forward.1} parent=1 // pred_check_branch
      %29 = sbr.rel (0) target = $region13
    $region12: #{model_forward.1} parent=1 // pred_region
      _
    $region13: #{model_forward.1} parent=1 // pred_fallthru
      _
    // Predicated region
    $region14: #{model_forward.1} parent=1 // pred_check
      _
    $region15: #{model_forward.1} parent=1 // pred_check_branch
      %31 = sbr.rel (0) target = $region17
    $region16: #{model_forward.1} parent=1 // pred_region
      _
    $region17: #{model_forward.1} parent=1 // pred_fallthru
      _
    // Predicated region
    $region18: #{model_forward.1} parent=1 // pred_check
      _
    $region19: #{model_forward.1} parent=1 // pred_check_branch
      %33 = sbr.rel (0) target = $region21
    $region20: #{model_forward.1} parent=1 // pred_region
      _
    $region21: #{model_forward.1} parent=1 // pred_fallthru
      _
    // Predicated region
    $region22: #{model_forward.1} parent=1 // pred_check
      _
    $region23: #{model_forward.1} parent=1 // pred_check_branch
      %35 = sbr.rel (0) target = $region25
    $region24: #{model_forward.1} parent=1 // pred_region
      _
    $region25: #{model_forward.1} parent=1 // pred_fallthru
      _
    // Predicated region
    $region26: #{model_forward.1} parent=1 // pred_check
      _
    $region27: #{model_forward.1} parent=1 // pred_check_branch
      %37 = sbr.rel (0) target = $region29
    $region28: #{model_forward.1} parent=1 // pred_region
      _
    $region29: #{model_forward.1} parent=1 // pred_fallthru
      _
    // Predicated region
    $region30: #{model_forward.1} parent=1 // pred_check
      _
    $region31: #{model_forward.1} parent=1 // pred_check_branch
      %39 = sbr.rel (0) target = $region33
    $region32: #{model_forward.1} parent=1 // pred_region
      _
    $region33: #{model_forward.1} parent=1 // pred_fallthru
      _
    // Predicated region
    $region34: #{model_forward.1} parent=1 // pred_check
      _
    $region35: #{model_forward.1} parent=1 // pred_check_branch
      %41 = sbr.rel (0) target = $region37
    $region36: #{model_forward.1} parent=1 // pred_region
      %s43 = ssub.s32 16, 16
      %44 = vsyncadd [#allocation5], %s43
      %s46 = sshll.u32 [#allocation4], 4
      %s47 = int_to_ptr.vmem [resolvable:$true] %s46
      %49 = dma.hbm_to_vmem [thread:$0]  %s8, 16, %s47, [#allocation5]
    $region37: #{model_forward.1} parent=1 // pred_fallthru
      _
    // Predicated region
    $region38: #{model_forward.1} parent=1 // pred_check
      _
    $region39: #{model_forward.1} parent=1 // pred_check_branch
      %51 = sbr.rel (0) target = $region41
    $region40: #{model_forward.1} parent=1 // pred_region
      %52 = dma.done [#allocation3], 64
    $region41: #{model_forward.1} parent=1 // pred_fallthru
      _
    // Predicated region
    $region42: #{model_forward.1} parent=1 // pred_check
      _
    $region43: #{model_forward.1} parent=1 // pred_check_branch
      %54 = sbr.rel (0) target = $region45
    $region44: #{model_forward.1} parent=1 // pred_region
      %55 = dma.done [#allocation5], 16
    $region45: #{model_forward.1} parent=1 // pred_fallthru
      _
    %v56 = vld [vmem:[%s0] sm:$0xff]
    %v57 = vld [vmem:[#allocation2] sm:$0xf]
    %v58 = vld [vmem:[%s2] sm:$0xff]
    %v59 = vld [vmem:[%s2 + $0x8] sm:$0xff]
    %v60 = vld [vmem:[%s2 + $0x10] sm:$0xff]
    %v61 = vld [vmem:[%s2 + $0x18] sm:$0xff]
    %v62 = vld [vmem:[%s3] sm:$0x1]
    %v64 = vlaneseq
    %v65 = vshrl.u32 %v64, 7
    %v66 = vsub.s32 0, %v65
    %v67 = vrot.slane %v62, %v66
    %vm69 = vcmask 31744
    %v71 = vsel %vm69, %v56, 0
    %vm73 = vcmask 1043456
    %v75 = vsel %vm73, %v57, 0
    %77 = vmatprep.subr.mxu0 0.0
    %78 = vmatpush1.msra.mxu0 %v75
    %79 = vmatprep.subr.mxu0 0.0
    %80 = vmatpush1.msra.mxu0 0.0
    %81 = vmatprep.subr.mxu0 0.0
    %82 = vmatpush1.msra.mxu0 0.0
    %83 = vmatprep.subr.mxu0 0.0
    %84 = vmatpush1.msra.mxu0 0.0
    %85 = vmatprep.subr.mxu0 0.0
    %86 = vmatpush1.msra.mxu0 0.0
    %87 = vmatprep.subr.mxu0 0.0
    %88 = vmatpush1.msra.mxu0 0.0
    %89 = vmatprep.subr.mxu0 0.0
    %90 = vmatpush1.msra.mxu0 0.0
    %91 = vmatprep.subr.mxu0 0.0
    %92 = vmatpush1.msra.mxu0 0.0
    %93 = vmatprep.subr.mxu0 0.0
    %94 = vmatpush1.msra.mxu0 0.0
    %95 = vmatprep.subr.mxu0 0.0
    %96 = vmatpush1.msra.mxu0 0.0
    %97 = vmatprep.subr.mxu0 0.0
    %98 = vmatpush1.msra.mxu0 0.0
    %99 = vmatprep.subr.mxu0 0.0
    %100 = vmatpush1.msra.mxu0 0.0
    %101 = vmatprep.subr.mxu0 0.0
    %102 = vmatpush1.msra.mxu0 0.0
    %103 = vmatprep.subr.mxu0 0.0
    %104 = vmatpush1.msra.mxu0 0.0
    %105 = vmatprep.subr.mxu0 0.0
    %106 = vmatpush1.msra.mxu0 0.0
    %107 = vmatprep.subr.mxu0 0.0
    %108 = vmatpush1.msra.mxu0 0.0
    %109 = vmatprep.subr.mxu0 0.0
    %110 = vmatpush1.msra.mxu0 0.0
    %111 = vmatprep.subr.mxu0 0.0
    %112 = vmatpush1.msra.mxu0 0.0
    %113 = vmatprep.subr.mxu0 0.0
    %114 = vmatpush1.msra.mxu0 0.0
    %115 = vmatprep.subr.mxu0 0.0
    %116 = vmatpush1.msra.mxu0 0.0
    %117 = vmatprep.subr.mxu0 0.0
    %118 = vmatpush1.msra.mxu0 0.0
    %119 = vmatprep.subr.mxu0 0.0
    %120 = vmatpush1.msra.mxu0 0.0
    %121 = vmatprep.subr.mxu0 0.0
    %122 = vmatpush1.msra.mxu0 0.0
    %123 = vmatprep.subr.mxu0 0.0
    %124 = vmatpush1.msra.mxu0 0.0
    %125 = vmatprep.subr.mxu0 0.0
    %126 = vmatpush1.msra.mxu0 0.0
    %127 = vmatprep.subr.mxu0 0.0
    %128 = vmatpush1.msra.mxu0 0.0
    %129 = vmatprep.subr.mxu0 0.0
    %130 = vmatpush1.msra.mxu0 0.0
    %131 = vmatprep.subr.mxu0 0.0
    %132 = vmatpush1.msra.mxu0 0.0
    %133 = vmatprep.subr.mxu0 0.0
    %134 = vmatpush1.msra.mxu0 0.0
    %135 = vmatprep.subr.mxu0 0.0
    %136 = vmatpush1.msra.mxu0 0.0
    %137 = vmatprep.subr.mxu0 0.0
    %138 = vmatpush1.msra.mxu0 0.0
    %139 = vmatprep.subr.mxu0 0.0
    %140 = vmatpush1.msra.mxu0 0.0
    %141 = vmatprep.mubr.f32.mxu0 0.0
    %142 = vmatmul.mubr.f32.gmra.mrb[0].mxu0 %v71
    %v143 = vpop.f32.mrb[0].mxu0
    %v144 = vadd.f32 %v67, %v143
    %v145 = vpop.f32.mrb[0].mxu0
    %146 = vdwg.mxu0
    %vm147 = vcmask 261120
    %v149 = vsel %vm147, 0.0, 0
    %151 = vmatprep.subr.mxu0 0.0
    %152 = vmatpush1.msra.mxu0 %v58
    %153 = vmatprep.subr.mxu0 0.0
    %154 = vmatpush1.msra.mxu0 %v59
    %155 = vmatprep.subr.mxu0 0.0
    %156 = vmatpush1.msra.mxu0 %v60
    %157 = vmatprep.subr.mxu0 0.0
    %158 = vmatpush1.msra.mxu0 %v61
    %159 = vmatprep.subr.mxu0 0.0
    %160 = vmatpush1.msra.mxu0 0.0
    %161 = vmatprep.subr.mxu0 0.0
    %162 = vmatpush1.msra.mxu0 0.0
    %163 = vmatprep.subr.mxu0 0.0
    %164 = vmatpush1.msra.mxu0 0.0
    %165 = vmatprep.subr.mxu0 0.0
    %166 = vmatpush1.msra.mxu0 0.0
    %167 = vmatprep.subr.mxu0 0.0
    %168 = vmatpush1.msra.mxu0 0.0
    %169 = vmatprep.subr.mxu0 0.0
    %170 = vmatpush1.msra.mxu0 0.0
    %171 = vmatprep.subr.mxu0 0.0
    %172 = vmatpush1.msra.mxu0 0.0
    %173 = vmatprep.subr.mxu0 0.0
    %174 = vmatpush1.msra.mxu0 0.0
    %175 = vmatprep.subr.mxu0 0.0
    %176 = vmatpush1.msra.mxu0 0.0
    %177 = vmatprep.subr.mxu0 0.0
    %178 = vmatpush1.msra.mxu0 0.0
    %179 = vmatprep.subr.mxu0 0.0
    %180 = vmatpush1.msra.mxu0 0.0
    %181 = vmatprep.subr.mxu0 0.0
    %182 = vmatpush1.msra.mxu0 0.0
    %183 = vmatprep.subr.mxu0 0.0
    %184 = vmatpush1.msra.mxu0 0.0
    %185 = vmatprep.subr.mxu0 0.0
    %186 = vmatpush1.msra.mxu0 0.0
    %187 = vmatprep.subr.mxu0 0.0
    %188 = vmatpush1.msra.mxu0 0.0
    %189 = vmatprep.subr.mxu0 0.0
    %190 = vmatpush1.msra.mxu0 0.0
    %191 = vmatprep.subr.mxu0 0.0
    %192 = vmatpush1.msra.mxu0 0.0
    %193 = vmatprep.subr.mxu0 0.0
    %194 = vmatpush1.msra.mxu0 0.0
    %195 = vmatprep.subr.mxu0 0.0
    %196 = vmatpush1.msra.mxu0 0.0
    %197 = vmatprep.subr.mxu0 0.0
    %198 = vmatpush1.msra.mxu0 0.0
    %199 = vmatprep.subr.mxu0 0.0
    %200 = vmatpush1.msra.mxu0 0.0
    %201 = vmatprep.subr.mxu0 0.0
    %202 = vmatpush1.msra.mxu0 0.0
    %203 = vmatprep.subr.mxu0 0.0
    %204 = vmatpush1.msra.mxu0 0.0
    %205 = vmatprep.subr.mxu0 0.0
    %206 = vmatpush1.msra.mxu0 0.0
    %207 = vmatprep.subr.mxu0 0.0
    %208 = vmatpush1.msra.mxu0 0.0
    %209 = vmatprep.subr.mxu0 0.0
    %210 = vmatpush1.msra.mxu0 0.0
    %211 = vmatprep.subr.mxu0 0.0
    %212 = vmatpush1.msra.mxu0 0.0
    %213 = vmatprep.subr.mxu0 0.0
    %214 = vmatpush1.msra.mxu0 0.0
    %215 = vmatprep.mubr.f32.mxu0 0.0
    %216 = vmatmul.mubr.f32.gmra.mrb[0].mxu0 %v149
    %v217 = vpop.f32.mrb[0].mxu0
    %v218 = vadd.f32 0.0, %v217
    %v219 = vpop.f32.mrb[0].mxu0
    %220 = vdwg.mxu0
    %v221 = vadd.f32 %v144, %v218
    %v222 = vxor.u32 %v221, 2147483648
    %v223 = vmul.f32 %v222, 1.442695
    %v224 = vpow.pop %v223
    %v225 = vadd.f32 %v224, 1.0
    %v226 = vrcp.pop %v225
    %v227 = vmul.f32 1.0, %v226
    %v228 = vtanh.pop %v221
    %v229 = vmul.f32 %v227, 0.0
    %231 = vrot.lane.b32.xlu0 %v228, 64
    %v232 = vpop.permute.xlu0 %231
    %v234 = vmul.f32 %v227, %v232
    %236 = vrot.lane.b32.xlu0 %v234, 32
    %v237 = vpop.permute.xlu0 %236
    %v239 = vadd.f32 %v229, %v237
    %v240 = vtanh.pop %v239
    %242 = vrot.lane.b32.xlu0 %v240, 64
    %v243 = vpop.permute.xlu0 %242
    %v245 = vmul.f32 %v227, %v243
    %247 = vrot.lane.b32.xlu0 %v245, 32
    %v248 = vpop.permute.xlu0 %247
    %v249 = vsel %vm147, %v248, 0
    %251 = vmatprep.subr.mxu0 0.0
    %252 = vmatpush1.msra.mxu0 %v58
    %253 = vmatprep.subr.mxu0 0.0
    %254 = vmatpush1.msra.mxu0 %v59
    %255 = vmatprep.subr.mxu0 0.0
    %256 = vmatpush1.msra.mxu0 %v60
    %257 = vmatprep.subr.mxu0 0.0
    %258 = vmatpush1.msra.mxu0 %v61
    %259 = vmatprep.subr.mxu0 0.0
    %260 = vmatpush1.msra.mxu0 0.0
    %261 = vmatprep.subr.mxu0 0.0
    %262 = vmatpush1.msra.mxu0 0.0
    %263 = vmatprep.subr.mxu0 0.0
    %264 = vmatpush1.msra.mxu0 0.0
    %265 = vmatprep.subr.mxu0 0.0
    %266 = vmatpush1.msra.mxu0 0.0
    %267 = vmatprep.subr.mxu0 0.0
    %268 = vmatpush1.msra.mxu0 0.0
    %269 = vmatprep.subr.mxu0 0.0
    %270 = vmatpush1.msra.mxu0 0.0
    %271 = vmatprep.subr.mxu0 0.0
    %272 = vmatpush1.msra.mxu0 0.0
    %273 = vmatprep.subr.mxu0 0.0
    %274 = vmatpush1.msra.mxu0 0.0
    %275 = vmatprep.subr.mxu0 0.0
    %276 = vmatpush1.msra.mxu0 0.0
    %277 = vmatprep.subr.mxu0 0.0
    %278 = vmatpush1.msra.mxu0 0.0
    %279 = vmatprep.subr.mxu0 0.0
    %280 = vmatpush1.msra.mxu0 0.0
    %281 = vmatprep.subr.mxu0 0.0
    %282 = vmatpush1.msra.mxu0 0.0
    %283 = vmatprep.subr.mxu0 0.0
    %284 = vmatpush1.msra.mxu0 0.0
    %285 = vmatprep.subr.mxu0 0.0
    %286 = vmatpush1.msra.mxu0 0.0
    %287 = vmatprep.subr.mxu0 0.0
    %288 = vmatpush1.msra.mxu0 0.0
    %289 = vmatprep.subr.mxu0 0.0
    %290 = vmatpush1.msra.mxu0 0.0
    %291 = vmatprep.subr.mxu0 0.0
    %292 = vmatpush1.msra.mxu0 0.0
    %293 = vmatprep.subr.mxu0 0.0
    %294 = vmatpush1.msra.mxu0 0.0
    %295 = vmatprep.subr.mxu0 0.0
    %296 = vmatpush1.msra.mxu0 0.0
    %297 = vmatprep.subr.mxu0 0.0
    %298 = vmatpush1.msra.mxu0 0.0
    %299 = vmatprep.subr.mxu0 0.0
    %300 = vmatpush1.msra.mxu0 0.0
    %301 = vmatprep.subr.mxu0 0.0
    %302 = vmatpush1.msra.mxu0 0.0
    %303 = vmatprep.subr.mxu0 0.0
    %304 = vmatpush1.msra.mxu0 0.0
    %305 = vmatprep.subr.mxu0 0.0
    %306 = vmatpush1.msra.mxu0 0.0
    %307 = vmatprep.subr.mxu0 0.0
    %308 = vmatpush1.msra.mxu0 0.0
    %309 = vmatprep.subr.mxu0 0.0
    %310 = vmatpush1.msra.mxu0 0.0
    %311 = vmatprep.subr.mxu0 0.0
    %312 = vmatpush1.msra.mxu0 0.0
    %313 = vmatprep.subr.mxu0 0.0
    %314 = vmatpush1.msra.mxu0 0.0
    %315 = vmatprep.mubr.f32.mxu0 0.0
    %316 = vmatmul.mubr.f32.gmra.mrb[0].mxu0 %v249
    %v317 = vpop.f32.mrb[0].mxu0
    %v318 = vadd.f32 0.0, %v317
    %v319 = vpop.f32.mrb[0].mxu0
    %320 = vdwg.mxu0
    %v322 = vrot.slane %v318, 6
    %v324 = vadd.f32 %v144, %v322
    %v325 = vxor.u32 %v324, 2147483648
    %v326 = vmul.f32 %v325, 1.442695
    %v327 = vpow.pop %v326
    %v328 = vadd.f32 %v327, 1.0
    %v329 = vrcp.pop %v328
    %v330 = vmul.f32 1.0, %v329
    %v331 = vtanh.pop %v324
    %v333 = vrot.slane %v239, 6
    %v335 = vmul.f32 %v330, %v333
    %337 = vrot.lane.b32.xlu0 %v331, 64
    %v338 = vpop.permute.xlu0 %337
    %v340 = vmul.f32 %v330, %v338
    %342 = vrot.lane.b32.xlu0 %v340, 32
    %v343 = vpop.permute.xlu0 %342
    %v345 = vadd.f32 %v335, %v343
    %v346 = vtanh.pop %v345
    %348 = vrot.lane.b32.xlu0 %v346, 64
    %v349 = vpop.permute.xlu0 %348
    %v351 = vmul.f32 %v330, %v349
    %v353 = vrot.slane %v351, 2
    %354 = vrot.lane.b32.xlu0 %v353, 32
    %v355 = vpop.permute.xlu0 %354
    %v356 = vsel %vm147, %v355, 0
    %358 = vmatprep.subr.mxu0 0.0
    %359 = vmatpush1.msra.mxu0 %v58
    %360 = vmatprep.subr.mxu0 0.0
    %361 = vmatpush1.msra.mxu0 %v59
    %362 = vmatprep.subr.mxu0 0.0
    %363 = vmatpush1.msra.mxu0 %v60
    %364 = vmatprep.subr.mxu0 0.0
    %365 = vmatpush1.msra.mxu0 %v61
    %366 = vmatprep.subr.mxu0 0.0
    %367 = vmatpush1.msra.mxu0 0.0
    %368 = vmatprep.subr.mxu0 0.0
    %369 = vmatpush1.msra.mxu0 0.0
    %370 = vmatprep.subr.mxu0 0.0
    %371 = vmatpush1.msra.mxu0 0.0
    %372 = vmatprep.subr.mxu0 0.0
    %373 = vmatpush1.msra.mxu0 0.0
    %374 = vmatprep.subr.mxu0 0.0
    %375 = vmatpush1.msra.mxu0 0.0
    %376 = vmatprep.subr.mxu0 0.0
    %377 = vmatpush1.msra.mxu0 0.0
    %378 = vmatprep.subr.mxu0 0.0
    %379 = vmatpush1.msra.mxu0 0.0
    %380 = vmatprep.subr.mxu0 0.0
    %381 = vmatpush1.msra.mxu0 0.0
    %382 = vmatprep.subr.mxu0 0.0
    %383 = vmatpush1.msra.mxu0 0.0
    %384 = vmatprep.subr.mxu0 0.0
    %385 = vmatpush1.msra.mxu0 0.0
    %386 = vmatprep.subr.mxu0 0.0
    %387 = vmatpush1.msra.mxu0 0.0
    %388 = vmatprep.subr.mxu0 0.0
    %389 = vmatpush1.msra.mxu0 0.0
    %390 = vmatprep.subr.mxu0 0.0
    %391 = vmatpush1.msra.mxu0 0.0
    %392 = vmatprep.subr.mxu0 0.0
    %393 = vmatpush1.msra.mxu0 0.0
    %394 = vmatprep.subr.mxu0 0.0
    %395 = vmatpush1.msra.mxu0 0.0
    %396 = vmatprep.subr.mxu0 0.0
    %397 = vmatpush1.msra.mxu0 0.0
    %398 = vmatprep.subr.mxu0 0.0
    %399 = vmatpush1.msra.mxu0 0.0
    %400 = vmatprep.subr.mxu0 0.0
    %401 = vmatpush1.msra.mxu0 0.0
    %402 = vmatprep.subr.mxu0 0.0
    %403 = vmatpush1.msra.mxu0 0.0
    %404 = vmatprep.subr.mxu0 0.0
    %405 = vmatpush1.msra.mxu0 0.0
    %406 = vmatprep.subr.mxu0 0.0
    %407 = vmatpush1.msra.mxu0 0.0
    %408 = vmatprep.subr.mxu0 0.0
    %409 = vmatpush1.msra.mxu0 0.0
    %410 = vmatprep.subr.mxu0 0.0
    %411 = vmatpush1.msra.mxu0 0.0
    %412 = vmatprep.subr.mxu0 0.0
    %413 = vmatpush1.msra.mxu0 0.0
    %414 = vmatprep.subr.mxu0 0.0
    %415 = vmatpush1.msra.mxu0 0.0
    %416 = vmatprep.subr.mxu0 0.0
    %417 = vmatpush1.msra.mxu0 0.0
    %418 = vmatprep.subr.mxu0 0.0
    %419 = vmatpush1.msra.mxu0 0.0
    %420 = vmatprep.subr.mxu0 0.0
    %421 = vmatpush1.msra.mxu0 0.0
    %422 = vmatprep.mubr.f32.mxu0 0.0
    %423 = vmatmul.mubr.f32.gmra.mrb[0].mxu0 %v356
    %v424 = vpop.f32.mrb[0].mxu0
    %v425 = vadd.f32 0.0, %v424
    %v426 = vpop.f32.mrb[0].mxu0
    %427 = vdwg.mxu0
    %v429 = vrot.slane %v425, 4
    %v431 = vadd.f32 %v144, %v429
    %v432 = vxor.u32 %v431, 2147483648
    %v433 = vmul.f32 %v432, 1.442695
    %v434 = vpow.pop %v433
    %v435 = vadd.f32 %v434, 1.0
    %v436 = vrcp.pop %v435
    %v437 = vmul.f32 1.0, %v436
    %v438 = vtanh.pop %v431
    %v440 = vrot.slane %v345, 6
    %v442 = vmul.f32 %v437, %v440
    %444 = vrot.lane.b32.xlu0 %v438, 64
    %v445 = vpop.permute.xlu0 %444
    %v447 = vmul.f32 %v437, %v445
    %449 = vrot.lane.b32.xlu0 %v447, 32
    %v450 = vpop.permute.xlu0 %449
    %v452 = vadd.f32 %v442, %v450
    %v453 = vtanh.pop %v452
    %455 = vrot.lane.b32.xlu0 %v453, 64
    %v456 = vpop.permute.xlu0 %455
    %v458 = vmul.f32 %v437, %v456
    %v460 = vrot.slane %v458, 4
    %461 = vrot.lane.b32.xlu0 %v460, 32
    %v462 = vpop.permute.xlu0 %461
    %v463 = vsel %vm147, %v462, 0
    %465 = vmatprep.subr.mxu0 0.0
    %466 = vmatpush1.msra.mxu0 %v58
    %467 = vmatprep.subr.mxu0 0.0
    %468 = vmatpush1.msra.mxu0 %v59
    %469 = vmatprep.subr.mxu0 0.0
    %470 = vmatpush1.msra.mxu0 %v60
    %471 = vmatprep.subr.mxu0 0.0
    %472 = vmatpush1.msra.mxu0 %v61
    %473 = vmatprep.subr.mxu0 0.0
    %474 = vmatpush1.msra.mxu0 0.0
    %475 = vmatprep.subr.mxu0 0.0
    %476 = vmatpush1.msra.mxu0 0.0
    %477 = vmatprep.subr.mxu0 0.0
    %478 = vmatpush1.msra.mxu0 0.0
    %479 = vmatprep.subr.mxu0 0.0
    %480 = vmatpush1.msra.mxu0 0.0
    %481 = vmatprep.subr.mxu0 0.0
    %482 = vmatpush1.msra.mxu0 0.0
    %483 = vmatprep.subr.mxu0 0.0
    %484 = vmatpush1.msra.mxu0 0.0
    %485 = vmatprep.subr.mxu0 0.0
    %486 = vmatpush1.msra.mxu0 0.0
    %487 = vmatprep.subr.mxu0 0.0
    %488 = vmatpush1.msra.mxu0 0.0
    %489 = vmatprep.subr.mxu0 0.0
    %490 = vmatpush1.msra.mxu0 0.0
    %491 = vmatprep.subr.mxu0 0.0
    %492 = vmatpush1.msra.mxu0 0.0
    %493 = vmatprep.subr.mxu0 0.0
    %494 = vmatpush1.msra.mxu0 0.0
    %495 = vmatprep.subr.mxu0 0.0
    %496 = vmatpush1.msra.mxu0 0.0
    %497 = vmatprep.subr.mxu0 0.0
    %498 = vmatpush1.msra.mxu0 0.0
    %499 = vmatprep.subr.mxu0 0.0
    %500 = vmatpush1.msra.mxu0 0.0
    %501 = vmatprep.subr.mxu0 0.0
    %502 = vmatpush1.msra.mxu0 0.0
    %503 = vmatprep.subr.mxu0 0.0
    %504 = vmatpush1.msra.mxu0 0.0
    %505 = vmatprep.subr.mxu0 0.0
    %506 = vmatpush1.msra.mxu0 0.0
    %507 = vmatprep.subr.mxu0 0.0
    %508 = vmatpush1.msra.mxu0 0.0
    %509 = vmatprep.subr.mxu0 0.0
    %510 = vmatpush1.msra.mxu0 0.0
    %511 = vmatprep.subr.mxu0 0.0
    %512 = vmatpush1.msra.mxu0 0.0
    %513 = vmatprep.subr.mxu0 0.0
    %514 = vmatpush1.msra.mxu0 0.0
    %515 = vmatprep.subr.mxu0 0.0
    %516 = vmatpush1.msra.mxu0 0.0
    %517 = vmatprep.subr.mxu0 0.0
    %518 = vmatpush1.msra.mxu0 0.0
    %519 = vmatprep.subr.mxu0 0.0
    %520 = vmatpush1.msra.mxu0 0.0
    %521 = vmatprep.subr.mxu0 0.0
    %522 = vmatpush1.msra.mxu0 0.0
    %523 = vmatprep.subr.mxu0 0.0
    %524 = vmatpush1.msra.mxu0 0.0
    %525 = vmatprep.subr.mxu0 0.0
    %526 = vmatpush1.msra.mxu0 0.0
    %527 = vmatprep.subr.mxu0 0.0
    %528 = vmatpush1.msra.mxu0 0.0
    %529 = vmatprep.mubr.f32.mxu0 0.0
    %530 = vmatmul.mubr.f32.gmra.mrb[0].mxu0 %v463
    %v531 = vpop.f32.mrb[0].mxu0
    %v532 = vadd.f32 0.0, %v531
    %v533 = vpop.f32.mrb[0].mxu0
    %534 = vdwg.mxu0
    %v536 = vrot.slane %v532, 2
    %v538 = vadd.f32 %v144, %v536
    %v539 = vxor.u32 %v538, 2147483648
    %v540 = vmul.f32 %v539, 1.442695
    %v541 = vpow.pop %v540
    %v542 = vadd.f32 %v541, 1.0
    %v543 = vrcp.pop %v542
    %v544 = vmul.f32 1.0, %v543
    %v545 = vtanh.pop %v538
    %v547 = vrot.slane %v452, 6
    %v549 = vmul.f32 %v544, %v547
    %551 = vrot.lane.b32.xlu0 %v545, 64
    %v552 = vpop.permute.xlu0 %551
    %v554 = vmul.f32 %v544, %v552
    %556 = vrot.lane.b32.xlu0 %v554, 32
    %v557 = vpop.permute.xlu0 %556
    %v559 = vadd.f32 %v549, %v557
    %v560 = vtanh.pop %v559
    %562 = vrot.lane.b32.xlu0 %v560, 64
    %v563 = vpop.permute.xlu0 %562
    %v565 = vmul.f32 %v544, %v563
    %vm566 = vcmask 1041408
    %v567 = vsel %vm566, %v245, %v351
    %v568 = vsel %vm73, %v567, %v458
    %vm569 = vcmask 1045504
    %v570 = vsel %vm569, %v568, %v565
    %v571 = vld [vmem:[%s4] sm:$0xff]
    %v572 = vld [vmem:[%s4 + $0x8] sm:$0xff]
    %v573 = vld [vmem:[%s4 + $0x10] sm:$0xff]
    %v574 = vld [vmem:[%s4 + $0x18] sm:$0xff]
    %v575 = vld [vmem:[%s5] sm:$0xff]
    %v576 = vld [vmem:[%s5 + $0x8] sm:$0xff]
    %v577 = vld [vmem:[%s5 + $0x10] sm:$0xff]
    %v578 = vld [vmem:[%s5 + $0x18] sm:$0xff]
    %v579 = vld [vmem:[%s6] sm:$0x1]
    %v581 = vlaneseq
    %v582 = vshrl.u32 %v581, 7
    %v583 = vsub.s32 0, %v582
    %v584 = vrot.slane %v579, %v583
    %587 = vrot.lane.b32.xlu0 %v570, 32
    %v588 = vpop.permute.xlu0 %587
    %v589 = vsel %vm147, %v588, 0
    %591 = vmatprep.subr.mxu0 0.0
    %592 = vmatpush1.msra.mxu0 %v571
    %593 = vmatprep.subr.mxu0 0.0
    %594 = vmatpush1.msra.mxu0 %v572
    %595 = vmatprep.subr.mxu0 0.0
    %596 = vmatpush1.msra.mxu0 %v573
    %597 = vmatprep.subr.mxu0 0.0
    %598 = vmatpush1.msra.mxu0 %v574
    %599 = vmatprep.subr.mxu0 0.0
    %600 = vmatpush1.msra.mxu0 0.0
    %601 = vmatprep.subr.mxu0 0.0
    %602 = vmatpush1.msra.mxu0 0.0
    %603 = vmatprep.subr.mxu0 0.0
    %604 = vmatpush1.msra.mxu0 0.0
    %605 = vmatprep.subr.mxu0 0.0
    %606 = vmatpush1.msra.mxu0 0.0
    %607 = vmatprep.subr.mxu0 0.0
    %608 = vmatpush1.msra.mxu0 0.0
    %609 = vmatprep.subr.mxu0 0.0
    %610 = vmatpush1.msra.mxu0 0.0
    %611 = vmatprep.subr.mxu0 0.0
    %612 = vmatpush1.msra.mxu0 0.0
    %613 = vmatprep.subr.mxu0 0.0
    %614 = vmatpush1.msra.mxu0 0.0
    %615 = vmatprep.subr.mxu0 0.0
    %616 = vmatpush1.msra.mxu0 0.0
    %617 = vmatprep.subr.mxu0 0.0
    %618 = vmatpush1.msra.mxu0 0.0
    %619 = vmatprep.subr.mxu0 0.0
    %620 = vmatpush1.msra.mxu0 0.0
    %621 = vmatprep.subr.mxu0 0.0
    %622 = vmatpush1.msra.mxu0 0.0
    %623 = vmatprep.subr.mxu0 0.0
    %624 = vmatpush1.msra.mxu0 0.0
    %625 = vmatprep.subr.mxu0 0.0
    %626 = vmatpush1.msra.mxu0 0.0
    %627 = vmatprep.subr.mxu0 0.0
    %628 = vmatpush1.msra.mxu0 0.0
    %629 = vmatprep.subr.mxu0 0.0
    %630 = vmatpush1.msra.mxu0 0.0
    %631 = vmatprep.subr.mxu0 0.0
    %632 = vmatpush1.msra.mxu0 0.0
    %633 = vmatprep.subr.mxu0 0.0
    %634 = vmatpush1.msra.mxu0 0.0
    %635 = vmatprep.subr.mxu0 0.0
    %636 = vmatpush1.msra.mxu0 0.0
    %637 = vmatprep.subr.mxu0 0.0
    %638 = vmatpush1.msra.mxu0 0.0
    %639 = vmatprep.subr.mxu0 0.0
    %640 = vmatpush1.msra.mxu0 0.0
    %641 = vmatprep.subr.mxu0 0.0
    %642 = vmatpush1.msra.mxu0 0.0
    %643 = vmatprep.subr.mxu0 0.0
    %644 = vmatpush1.msra.mxu0 0.0
    %645 = vmatprep.subr.mxu0 0.0
    %646 = vmatpush1.msra.mxu0 0.0
    %647 = vmatprep.subr.mxu0 0.0
    %648 = vmatpush1.msra.mxu0 0.0
    %649 = vmatprep.subr.mxu0 0.0
    %650 = vmatpush1.msra.mxu0 0.0
    %651 = vmatprep.subr.mxu0 0.0
    %652 = vmatpush1.msra.mxu0 0.0
    %653 = vmatprep.subr.mxu0 0.0
    %654 = vmatpush1.msra.mxu0 0.0
    %655 = vmatprep.mubr.f32.mxu0 0.0
    %656 = vmatmul.mubr.f32.gmra.mrb[0].mxu0 %v589
    %v657 = vpop.f32.mrb[0].mxu0
    %v658 = vadd.f32 %v584, %v657
    %v659 = vpop.f32.mrb[0].mxu0
    %660 = vdwg.mxu0
    %661 = vmatprep.subr.mxu0 0.0
    %662 = vmatpush1.msra.mxu0 %v575
    %663 = vmatprep.subr.mxu0 0.0
    %664 = vmatpush1.msra.mxu0 %v576
    %665 = vmatprep.subr.mxu0 0.0
    %666 = vmatpush1.msra.mxu0 %v577
    %667 = vmatprep.subr.mxu0 0.0
    %668 = vmatpush1.msra.mxu0 %v578
    %669 = vmatprep.subr.mxu0 0.0
    %670 = vmatpush1.msra.mxu0 0.0
    %671 = vmatprep.subr.mxu0 0.0
    %672 = vmatpush1.msra.mxu0 0.0
    %673 = vmatprep.subr.mxu0 0.0
    %674 = vmatpush1.msra.mxu0 0.0
    %675 = vmatprep.subr.mxu0 0.0
    %676 = vmatpush1.msra.mxu0 0.0
    %677 = vmatprep.subr.mxu0 0.0
    %678 = vmatpush1.msra.mxu0 0.0
    %679 = vmatprep.subr.mxu0 0.0
    %680 = vmatpush1.msra.mxu0 0.0
    %681 = vmatprep.subr.mxu0 0.0
    %682 = vmatpush1.msra.mxu0 0.0
    %683 = vmatprep.subr.mxu0 0.0
    %684 = vmatpush1.msra.mxu0 0.0
    %685 = vmatprep.subr.mxu0 0.0
    %686 = vmatpush1.msra.mxu0 0.0
    %687 = vmatprep.subr.mxu0 0.0
    %688 = vmatpush1.msra.mxu0 0.0
    %689 = vmatprep.subr.mxu0 0.0
    %690 = vmatpush1.msra.mxu0 0.0
    %691 = vmatprep.subr.mxu0 0.0
    %692 = vmatpush1.msra.mxu0 0.0
    %693 = vmatprep.subr.mxu0 0.0
    %694 = vmatpush1.msra.mxu0 0.0
    %695 = vmatprep.subr.mxu0 0.0
    %696 = vmatpush1.msra.mxu0 0.0
    %697 = vmatprep.subr.mxu0 0.0
    %698 = vmatpush1.msra.mxu0 0.0
    %699 = vmatprep.subr.mxu0 0.0
    %700 = vmatpush1.msra.mxu0 0.0
    %701 = vmatprep.subr.mxu0 0.0
    %702 = vmatpush1.msra.mxu0 0.0
    %703 = vmatprep.subr.mxu0 0.0
    %704 = vmatpush1.msra.mxu0 0.0
    %705 = vmatprep.subr.mxu0 0.0
    %706 = vmatpush1.msra.mxu0 0.0
    %707 = vmatprep.subr.mxu0 0.0
    %708 = vmatpush1.msra.mxu0 0.0
    %709 = vmatprep.subr.mxu0 0.0
    %710 = vmatpush1.msra.mxu0 0.0
    %711 = vmatprep.subr.mxu0 0.0
    %712 = vmatpush1.msra.mxu0 0.0
    %713 = vmatprep.subr.mxu0 0.0
    %714 = vmatpush1.msra.mxu0 0.0
    %715 = vmatprep.subr.mxu0 0.0
    %716 = vmatpush1.msra.mxu0 0.0
    %717 = vmatprep.subr.mxu0 0.0
    %718 = vmatpush1.msra.mxu0 0.0
    %719 = vmatprep.subr.mxu0 0.0
    %720 = vmatpush1.msra.mxu0 0.0
    %721 = vmatprep.subr.mxu0 0.0
    %722 = vmatpush1.msra.mxu0 0.0
    %723 = vmatprep.subr.mxu0 0.0
    %724 = vmatpush1.msra.mxu0 0.0
    %725 = vmatprep.mubr.f32.mxu0 0.0
    %726 = vmatmul.mubr.f32.gmra.mrb[0].mxu0 %v149
    %v727 = vpop.f32.mrb[0].mxu0
    %v728 = vadd.f32 0.0, %v727
    %v729 = vpop.f32.mrb[0].mxu0
    %730 = vdwg.mxu0
    %v731 = vadd.f32 %v658, %v728
    %v732 = vxor.u32 %v731, 2147483648
    %v733 = vmul.f32 %v732, 1.442695
    %v734 = vpow.pop %v733
    %v735 = vadd.f32 %v734, 1.0
    %v736 = vrcp.pop %v735
    %v737 = vmul.f32 1.0, %v736
    %v738 = vtanh.pop %v731
    %v739 = vmul.f32 %v737, 0.0
    %741 = vrot.lane.b32.xlu0 %v738, 64
    %v742 = vpop.permute.xlu0 %741
    %v744 = vmul.f32 %v737, %v742
    %746 = vrot.lane.b32.xlu0 %v744, 32
    %v747 = vpop.permute.xlu0 %746
    %v749 = vadd.f32 %v739, %v747
    %v750 = vtanh.pop %v749
    %752 = vrot.lane.b32.xlu0 %v750, 64
    %v753 = vpop.permute.xlu0 %752
    %v755 = vmul.f32 %v737, %v753
    %757 = vrot.lane.b32.xlu0 %v755, 32
    %v758 = vpop.permute.xlu0 %757
    %v759 = vsel %vm147, %v758, 0
    %761 = vmatprep.subr.mxu0 0.0
    %762 = vmatpush1.msra.mxu0 %v575
    %763 = vmatprep.subr.mxu0 0.0
    %764 = vmatpush1.msra.mxu0 %v576
    %765 = vmatprep.subr.mxu0 0.0
    %766 = vmatpush1.msra.mxu0 %v577
    %767 = vmatprep.subr.mxu0 0.0
    %768 = vmatpush1.msra.mxu0 %v578
    %769 = vmatprep.subr.mxu0 0.0
    %770 = vmatpush1.msra.mxu0 0.0
    %771 = vmatprep.subr.mxu0 0.0
    %772 = vmatpush1.msra.mxu0 0.0
    %773 = vmatprep.subr.mxu0 0.0
    %774 = vmatpush1.msra.mxu0 0.0
    %775 = vmatprep.subr.mxu0 0.0
    %776 = vmatpush1.msra.mxu0 0.0
    %777 = vmatprep.subr.mxu0 0.0
    %778 = vmatpush1.msra.mxu0 0.0
    %779 = vmatprep.subr.mxu0 0.0
    %780 = vmatpush1.msra.mxu0 0.0
    %781 = vmatprep.subr.mxu0 0.0
    %782 = vmatpush1.msra.mxu0 0.0
    %783 = vmatprep.subr.mxu0 0.0
    %784 = vmatpush1.msra.mxu0 0.0
    %785 = vmatprep.subr.mxu0 0.0
    %786 = vmatpush1.msra.mxu0 0.0
    %787 = vmatprep.subr.mxu0 0.0
    %788 = vmatpush1.msra.mxu0 0.0
    %789 = vmatprep.subr.mxu0 0.0
    %790 = vmatpush1.msra.mxu0 0.0
    %791 = vmatprep.subr.mxu0 0.0
    %792 = vmatpush1.msra.mxu0 0.0
    %793 = vmatprep.subr.mxu0 0.0
    %794 = vmatpush1.msra.mxu0 0.0
    %795 = vmatprep.subr.mxu0 0.0
    %796 = vmatpush1.msra.mxu0 0.0
    %797 = vmatprep.subr.mxu0 0.0
    %798 = vmatpush1.msra.mxu0 0.0
    %799 = vmatprep.subr.mxu0 0.0
    %800 = vmatpush1.msra.mxu0 0.0
    %801 = vmatprep.subr.mxu0 0.0
    %802 = vmatpush1.msra.mxu0 0.0
    %803 = vmatprep.subr.mxu0 0.0
    %804 = vmatpush1.msra.mxu0 0.0
    %805 = vmatprep.subr.mxu0 0.0
    %806 = vmatpush1.msra.mxu0 0.0
    %807 = vmatprep.subr.mxu0 0.0
    %808 = vmatpush1.msra.mxu0 0.0
    %809 = vmatprep.subr.mxu0 0.0
    %810 = vmatpush1.msra.mxu0 0.0
    %811 = vmatprep.subr.mxu0 0.0
    %812 = vmatpush1.msra.mxu0 0.0
    %813 = vmatprep.subr.mxu0 0.0
    %814 = vmatpush1.msra.mxu0 0.0
    %815 = vmatprep.subr.mxu0 0.0
    %816 = vmatpush1.msra.mxu0 0.0
    %817 = vmatprep.subr.mxu0 0.0
    %818 = vmatpush1.msra.mxu0 0.0
    %819 = vmatprep.subr.mxu0 0.0
    %820 = vmatpush1.msra.mxu0 0.0
    %821 = vmatprep.subr.mxu0 0.0
    %822 = vmatpush1.msra.mxu0 0.0
    %823 = vmatprep.subr.mxu0 0.0
    %824 = vmatpush1.msra.mxu0 0.0
    %825 = vmatprep.mubr.f32.mxu0 0.0
    %826 = vmatmul.mubr.f32.gmra.mrb[0].mxu0 %v759
    %v827 = vpop.f32.mrb[0].mxu0
    %v828 = vadd.f32 0.0, %v827
    %v829 = vpop.f32.mrb[0].mxu0
    %830 = vdwg.mxu0
    %v832 = vrot.slane %v828, 6
    %v834 = vadd.f32 %v658, %v832
    %v835 = vxor.u32 %v834, 2147483648
    %v836 = vmul.f32 %v835, 1.442695
    %v837 = vpow.pop %v836
    %v838 = vadd.f32 %v837, 1.0
    %v839 = vrcp.pop %v838
    %v840 = vmul.f32 1.0, %v839
    %v841 = vtanh.pop %v834
    %v843 = vrot.slane %v749, 6
    %v845 = vmul.f32 %v840, %v843
    %847 = vrot.lane.b32.xlu0 %v841, 64
    %v848 = vpop.permute.xlu0 %847
    %v850 = vmul.f32 %v840, %v848
    %852 = vrot.lane.b32.xlu0 %v850, 32
    %v853 = vpop.permute.xlu0 %852
    %v855 = vadd.f32 %v845, %v853
    %v856 = vtanh.pop %v855
    %858 = vrot.lane.b32.xlu0 %v856, 64
    %v859 = vpop.permute.xlu0 %858
    %v861 = vmul.f32 %v840, %v859
    %v863 = vrot.slane %v861, 2
    %864 = vrot.lane.b32.xlu0 %v863, 32
    %v865 = vpop.permute.xlu0 %864
    %v866 = vsel %vm147, %v865, 0
    %868 = vmatprep.subr.mxu0 0.0
    %869 = vmatpush1.msra.mxu0 %v575
    %870 = vmatprep.subr.mxu0 0.0
    %871 = vmatpush1.msra.mxu0 %v576
    %872 = vmatprep.subr.mxu0 0.0
    %873 = vmatpush1.msra.mxu0 %v577
    %874 = vmatprep.subr.mxu0 0.0
    %875 = vmatpush1.msra.mxu0 %v578
    %876 = vmatprep.subr.mxu0 0.0
    %877 = vmatpush1.msra.mxu0 0.0
    %878 = vmatprep.subr.mxu0 0.0
    %879 = vmatpush1.msra.mxu0 0.0
    %880 = vmatprep.subr.mxu0 0.0
    %881 = vmatpush1.msra.mxu0 0.0
    %882 = vmatprep.subr.mxu0 0.0
    %883 = vmatpush1.msra.mxu0 0.0
    %884 = vmatprep.subr.mxu0 0.0
    %885 = vmatpush1.msra.mxu0 0.0
    %886 = vmatprep.subr.mxu0 0.0
    %887 = vmatpush1.msra.mxu0 0.0
    %888 = vmatprep.subr.mxu0 0.0
    %889 = vmatpush1.msra.mxu0 0.0
    %890 = vmatprep.subr.mxu0 0.0
    %891 = vmatpush1.msra.mxu0 0.0
    %892 = vmatprep.subr.mxu0 0.0
    %893 = vmatpush1.msra.mxu0 0.0
    %894 = vmatprep.subr.mxu0 0.0
    %895 = vmatpush1.msra.mxu0 0.0
    %896 = vmatprep.subr.mxu0 0.0
    %897 = vmatpush1.msra.mxu0 0.0
    %898 = vmatprep.subr.mxu0 0.0
    %899 = vmatpush1.msra.mxu0 0.0
    %900 = vmatprep.subr.mxu0 0.0
    %901 = vmatpush1.msra.mxu0 0.0
    %902 = vmatprep.subr.mxu0 0.0
    %903 = vmatpush1.msra.mxu0 0.0
    %904 = vmatprep.subr.mxu0 0.0
    %905 = vmatpush1.msra.mxu0 0.0
    %906 = vmatprep.subr.mxu0 0.0
    %907 = vmatpush1.msra.mxu0 0.0
    %908 = vmatprep.subr.mxu0 0.0
    %909 = vmatpush1.msra.mxu0 0.0
    %910 = vmatprep.subr.mxu0 0.0
    %911 = vmatpush1.msra.mxu0 0.0
    %912 = vmatprep.subr.mxu0 0.0
    %913 = vmatpush1.msra.mxu0 0.0
    %914 = vmatprep.subr.mxu0 0.0
    %915 = vmatpush1.msra.mxu0 0.0
    %916 = vmatprep.subr.mxu0 0.0
    %917 = vmatpush1.msra.mxu0 0.0
    %918 = vmatprep.subr.mxu0 0.0
    %919 = vmatpush1.msra.mxu0 0.0
    %920 = vmatprep.subr.mxu0 0.0
    %921 = vmatpush1.msra.mxu0 0.0
    %922 = vmatprep.subr.mxu0 0.0
    %923 = vmatpush1.msra.mxu0 0.0
    %924 = vmatprep.subr.mxu0 0.0
    %925 = vmatpush1.msra.mxu0 0.0
    %926 = vmatprep.subr.mxu0 0.0
    %927 = vmatpush1.msra.mxu0 0.0
    %928 = vmatprep.subr.mxu0 0.0
    %929 = vmatpush1.msra.mxu0 0.0
    %930 = vmatprep.subr.mxu0 0.0
    %931 = vmatpush1.msra.mxu0 0.0
    %932 = vmatprep.mubr.f32.mxu0 0.0
    %933 = vmatmul.mubr.f32.gmra.mrb[0].mxu0 %v866
    %v934 = vpop.f32.mrb[0].mxu0
    %v935 = vadd.f32 0.0, %v934
    %v936 = vpop.f32.mrb[0].mxu0
    %937 = vdwg.mxu0
    %v939 = vrot.slane %v935, 4
    %v941 = vadd.f32 %v658, %v939
    %v942 = vxor.u32 %v941, 2147483648
    %v943 = vmul.f32 %v942, 1.442695
    %v944 = vpow.pop %v943
    %v945 = vadd.f32 %v944, 1.0
    %v946 = vrcp.pop %v945
    %v947 = vmul.f32 1.0, %v946
    %v948 = vtanh.pop %v941
    %v950 = vrot.slane %v855, 6
    %v952 = vmul.f32 %v947, %v950
    %954 = vrot.lane.b32.xlu0 %v948, 64
    %v955 = vpop.permute.xlu0 %954
    %v957 = vmul.f32 %v947, %v955
    %959 = vrot.lane.b32.xlu0 %v957, 32
    %v960 = vpop.permute.xlu0 %959
    %v962 = vadd.f32 %v952, %v960
    %v963 = vtanh.pop %v962
    %965 = vrot.lane.b32.xlu0 %v963, 64
    %v966 = vpop.permute.xlu0 %965
    %v968 = vmul.f32 %v947, %v966
    %v970 = vrot.slane %v968, 4
    %971 = vrot.lane.b32.xlu0 %v970, 32
    %v972 = vpop.permute.xlu0 %971
    %v973 = vsel %vm147, %v972, 0
    %975 = vmatprep.subr.mxu0 0.0
    %976 = vmatpush1.msra.mxu0 %v575
    %977 = vmatprep.subr.mxu0 0.0
    %978 = vmatpush1.msra.mxu0 %v576
    %979 = vmatprep.subr.mxu0 0.0
    %980 = vmatpush1.msra.mxu0 %v577
    %981 = vmatprep.subr.mxu0 0.0
    %982 = vmatpush1.msra.mxu0 %v578
    %983 = vmatprep.subr.mxu0 0.0
    %984 = vmatpush1.msra.mxu0 0.0
    %985 = vmatprep.subr.mxu0 0.0
    %986 = vmatpush1.msra.mxu0 0.0
    %987 = vmatprep.subr.mxu0 0.0
    %988 = vmatpush1.msra.mxu0 0.0
    %989 = vmatprep.subr.mxu0 0.0
    %990 = vmatpush1.msra.mxu0 0.0
    %991 = vmatprep.subr.mxu0 0.0
    %992 = vmatpush1.msra.mxu0 0.0
    %993 = vmatprep.subr.mxu0 0.0
    %994 = vmatpush1.msra.mxu0 0.0
    %995 = vmatprep.subr.mxu0 0.0
    %996 = vmatpush1.msra.mxu0 0.0
    %997 = vmatprep.subr.mxu0 0.0
    %998 = vmatpush1.msra.mxu0 0.0
    %999 = vmatprep.subr.mxu0 0.0
    %1000 = vmatpush1.msra.mxu0 0.0
    %1001 = vmatprep.subr.mxu0 0.0
    %1002 = vmatpush1.msra.mxu0 0.0
    %1003 = vmatprep.subr.mxu0 0.0
    %1004 = vmatpush1.msra.mxu0 0.0
    %1005 = vmatprep.subr.mxu0 0.0
    %1006 = vmatpush1.msra.mxu0 0.0
    %1007 = vmatprep.subr.mxu0 0.0
    %1008 = vmatpush1.msra.mxu0 0.0
    %1009 = vmatprep.subr.mxu0 0.0
    %1010 = vmatpush1.msra.mxu0 0.0
    %1011 = vmatprep.subr.mxu0 0.0
    %1012 = vmatpush1.msra.mxu0 0.0
    %1013 = vmatprep.subr.mxu0 0.0
    %1014 = vmatpush1.msra.mxu0 0.0
    %1015 = vmatprep.subr.mxu0 0.0
    %1016 = vmatpush1.msra.mxu0 0.0
    %1017 = vmatprep.subr.mxu0 0.0
    %1018 = vmatpush1.msra.mxu0 0.0
    %1019 = vmatprep.subr.mxu0 0.0
    %1020 = vmatpush1.msra.mxu0 0.0
    %1021 = vmatprep.subr.mxu0 0.0
    %1022 = vmatpush1.msra.mxu0 0.0
    %1023 = vmatprep.subr.mxu0 0.0
    %1024 = vmatpush1.msra.mxu0 0.0
    %1025 = vmatprep.subr.mxu0 0.0
    %1026 = vmatpush1.msra.mxu0 0.0
    %1027 = vmatprep.subr.mxu0 0.0
    %1028 = vmatpush1.msra.mxu0 0.0
    %1029 = vmatprep.subr.mxu0 0.0
    %1030 = vmatpush1.msra.mxu0 0.0
    %1031 = vmatprep.subr.mxu0 0.0
    %1032 = vmatpush1.msra.mxu0 0.0
    %1033 = vmatprep.subr.mxu0 0.0
    %1034 = vmatpush1.msra.mxu0 0.0
    %1035 = vmatprep.subr.mxu0 0.0
    %1036 = vmatpush1.msra.mxu0 0.0
    %1037 = vmatprep.subr.mxu0 0.0
    %1038 = vmatpush1.msra.mxu0 0.0
    %1039 = vmatprep.mubr.f32.mxu0 0.0
    %1040 = vmatmul.mubr.f32.gmra.mrb[0].mxu0 %v973
    %v1041 = vpop.f32.mrb[0].mxu0
    %v1042 = vadd.f32 0.0, %v1041
    %v1043 = vpop.f32.mrb[0].mxu0
    %1044 = vdwg.mxu0
    %v1046 = vrot.slane %v1042, 2
    %v1048 = vadd.f32 %v658, %v1046
    %v1049 = vxor.u32 %v1048, 2147483648
    %v1050 = vmul.f32 %v1049, 1.442695
    %v1051 = vpow.pop %v1050
    %v1052 = vadd.f32 %v1051, 1.0
    %v1053 = vrcp.pop %v1052
    %v1054 = vmul.f32 1.0, %v1053
    %v1055 = vtanh.pop %v1048
    %v1057 = vrot.slane %v962, 6
    %v1059 = vmul.f32 %v1054, %v1057
    %1061 = vrot.lane.b32.xlu0 %v1055, 64
    %v1062 = vpop.permute.xlu0 %1061
    %v1064 = vmul.f32 %v1054, %v1062
    %1066 = vrot.lane.b32.xlu0 %v1064, 32
    %v1067 = vpop.permute.xlu0 %1066
    %v1069 = vadd.f32 %v1059, %v1067
    %v1070 = vtanh.pop %v1069
    %1072 = vrot.lane.b32.xlu0 %v1070, 64
    %v1073 = vpop.permute.xlu0 %1072
    %v1075 = vmul.f32 %v1054, %v1073
    %v1076 = vsel %vm566, %v755, %v861
    %v1077 = vsel %vm73, %v1076, %v968
    %v1078 = vsel %vm569, %v1077, %v1075
    %v1079 = vld [vmem:[%s7] sm:$0xff]
    %v1080 = vld [vmem:[%s7 + $0x8] sm:$0xff]
    %v1081 = vld [vmem:[%s7 + $0x10] sm:$0xff]
    %v1082 = vld [vmem:[%s7 + $0x18] sm:$0xff]
    %v1083 = vld [vmem:[#allocation4] sm:$0x1]
    %v1085 = vlaneseq
    %v1086 = vshrl.u32 %v1085, 7
    %v1087 = vsub.s32 0, %v1086
    %v1088 = vrot.slane %v1083, %v1087
    %1091 = vrot.lane.b32.xlu0 %v1078, 32
    %v1092 = vpop.permute.xlu0 %1091
    %v1093 = vsel %vm147, %v1092, 0
    %1095 = vmatprep.subr.mxu0 0.0
    %1096 = vmatpush1.msra.mxu0 %v1079
    %1097 = vmatprep.subr.mxu0 0.0
    %1098 = vmatpush1.msra.mxu0 %v1080
    %1099 = vmatprep.subr.mxu0 0.0
    %1100 = vmatpush1.msra.mxu0 %v1081
    %1101 = vmatprep.subr.mxu0 0.0
    %1102 = vmatpush1.msra.mxu0 %v1082
    %1103 = vmatprep.subr.mxu0 0.0
    %1104 = vmatpush1.msra.mxu0 0.0
    %1105 = vmatprep.subr.mxu0 0.0
    %1106 = vmatpush1.msra.mxu0 0.0
    %1107 = vmatprep.subr.mxu0 0.0
    %1108 = vmatpush1.msra.mxu0 0.0
    %1109 = vmatprep.subr.mxu0 0.0
    %1110 = vmatpush1.msra.mxu0 0.0
    %1111 = vmatprep.subr.mxu0 0.0
    %1112 = vmatpush1.msra.mxu0 0.0
    %1113 = vmatprep.subr.mxu0 0.0
    %1114 = vmatpush1.msra.mxu0 0.0
    %1115 = vmatprep.subr.mxu0 0.0
    %1116 = vmatpush1.msra.mxu0 0.0
    %1117 = vmatprep.subr.mxu0 0.0
    %1118 = vmatpush1.msra.mxu0 0.0
    %1119 = vmatprep.subr.mxu0 0.0
    %1120 = vmatpush1.msra.mxu0 0.0
    %1121 = vmatprep.subr.mxu0 0.0
    %1122 = vmatpush1.msra.mxu0 0.0
    %1123 = vmatprep.subr.mxu0 0.0
    %1124 = vmatpush1.msra.mxu0 0.0
    %1125 = vmatprep.subr.mxu0 0.0
    %1126 = vmatpush1.msra.mxu0 0.0
    %1127 = vmatprep.subr.mxu0 0.0
    %1128 = vmatpush1.msra.mxu0 0.0
    %1129 = vmatprep.subr.mxu0 0.0
    %1130 = vmatpush1.msra.mxu0 0.0
    %1131 = vmatprep.subr.mxu0 0.0
    %1132 = vmatpush1.msra.mxu0 0.0
    %1133 = vmatprep.subr.mxu0 0.0
    %1134 = vmatpush1.msra.mxu0 0.0
    %1135 = vmatprep.subr.mxu0 0.0
    %1136 = vmatpush1.msra.mxu0 0.0
    %1137 = vmatprep.subr.mxu0 0.0
    %1138 = vmatpush1.msra.mxu0 0.0
    %1139 = vmatprep.subr.mxu0 0.0
    %1140 = vmatpush1.msra.mxu0 0.0
    %1141 = vmatprep.subr.mxu0 0.0
    %1142 = vmatpush1.msra.mxu0 0.0
    %1143 = vmatprep.subr.mxu0 0.0
    %1144 = vmatpush1.msra.mxu0 0.0
    %1145 = vmatprep.subr.mxu0 0.0
    %1146 = vmatpush1.msra.mxu0 0.0
    %1147 = vmatprep.subr.mxu0 0.0
    %1148 = vmatpush1.msra.mxu0 0.0
    %1149 = vmatprep.subr.mxu0 0.0
    %1150 = vmatpush1.msra.mxu0 0.0
    %1151 = vmatprep.subr.mxu0 0.0
    %1152 = vmatpush1.msra.mxu0 0.0
    %1153 = vmatprep.subr.mxu0 0.0
    %1154 = vmatpush1.msra.mxu0 0.0
    %1155 = vmatprep.subr.mxu0 0.0
    %1156 = vmatpush1.msra.mxu0 0.0
    %1157 = vmatprep.subr.mxu0 0.0
    %1158 = vmatpush1.msra.mxu0 0.0
    %1159 = vmatprep.mubr.f32.mxu0 0.0
    %1160 = vmatmul.mubr.f32.gmra.mrb[0].mxu0 %v1093
    %v1161 = vpop.f32.mrb[0].mxu0
    %v1162 = vadd.f32 %v1088, %v1161
    %v1163 = vpop.f32.mrb[0].mxu0
    %1164 = vdwg.mxu0
    %1165 = vst.msk [vmem:[%s9] sm:$0xff] %vm69, %v1162
    // Predicated region
    $region46: #{model_forward.1} parent=1 // pred_check
      _
    $region47: #{model_forward.1} parent=1 // pred_check_branch
      %1167 = sbr.rel (0) target = $region49
    $region48: #{model_forward.1} parent=1 // pred_region
      _
    $region49: #{model_forward.1} parent=1 // pred_fallthru
      _
    // Predicated region
    $region50: #{model_forward.1} parent=1 // pred_check
      _
    $region51: #{model_forward.1} parent=1 // pred_check_branch
      %1169 = sbr.rel (0) target = $region53
    $region52: #{model_forward.1} parent=1 // pred_region
      _
    $region53: #{model_forward.1} parent=1 // pred_fallthru
      _
    %1170 = vsyncpa [#allocation3], 1
    %1171 = vsyncpa [#allocation5], 1

</llo_original>
